<compile_context>
chip_gen: v5e
topology: v5e:2x2
jax: 0.10.0
libtpu: 0.0.40
codegen_flags: <defaults>
</compile_context>

<pallas_src>
import functools

import jax
import jax.numpy as jnp
from jax.experimental import pallas as pl
from jax.experimental.pallas import tpu as pltpu


# ---------------------------------------------------------------------------
# Kernel
# ---------------------------------------------------------------------------
def _focal_loss_kernel(x_ref, t_ref, ag_ref, o_ref, acc_ref, *, gamma):
    step = pl.program_id(1)   # tile within this partition (reduction axis)

    @pl.when(step == 0)
    def _():
        acc_ref[...] = jnp.zeros_like(acc_ref)

    x = x_ref[...]            # (tile_n, C) f32 logits
    t = t_ref[...]            # (tile_n, 1) i32 targets
    ag = ag_ref[...]          # (tile_n, 1) f32 alpha[target]; 0 for pad rows
    tn, c = x.shape

    # Numerically stable log-sum-exp pieces; only the target-class
    # log-probability is needed, so skip the full (N, C) softmax divide.
    m = jnp.max(x, axis=1, keepdims=True)                        # (tile_n, 1)
    denom = jnp.sum(jnp.exp(x - m), axis=1, keepdims=True)       # (tile_n, 1)

    # Gather the target logit via select + row reduce.
    col = jax.lax.broadcasted_iota(jnp.int32, (tn, c), 1)
    x_t = jnp.sum(jnp.where(col == t, x, 0.0), axis=1, keepdims=True)

    log_p = x_t - m - jnp.log(denom)          # log softmax at target class
    probs = jnp.exp(log_p)
    d = 1.0 - probs
    # TODO(synk): d = -expm1(log_p) would be more accurate near probs ~= 1,
    # but 1 - exp(log_p) matches the PyTorch reference bit-for-bit.

    if float(gamma) == int(gamma) and int(gamma) >= 0:
        mod = jax.lax.integer_pow(d, int(gamma))   # VPU multiply chain
    else:
        mod = jnp.power(d, gamma)                  # fractional gamma fallback

    # Padded rows have ag == 0 -> contribute exactly 0 (log_p stays finite).
    loss_row = -ag * mod * log_p                                 # (tile_n, 1)
    acc_ref[...] += jnp.sum(loss_row, axis=(0, 1), keepdims=True)

    @pl.when(step == pl.num_programs(1) - 1)
    def _():
        # Lane-dense (8, 128) output block; wrapper reads element [part*8, 0].
        o_ref[...] = jnp.broadcast_to(acc_ref[...], o_ref.shape)


# ---------------------------------------------------------------------------
# Hardware-aware sizing helpers
# ---------------------------------------------------------------------------
def _tpu_hw():
    """(vmem_capacity_bytes or None, tensorcores_per_chip)."""
    vmem = None
    cores = 1
    try:
        info = pltpu.get_tpu_info()
        vmem = getattr(info, "vmem_capacity_bytes", None)
        for attr in ("num_cores", "tensorcores_per_chip", "num_tensorcores",
                     "cores_per_chip", "core_count"):
            v = getattr(info, attr, None)
            if isinstance(v, int) and v > 0:
                cores = v
                break
    except Exception:
        pass
    return vmem, cores


def _budgets(vmem_capacity):
    """(pipelined-input VMEM budget, vmem_limit_bytes) per generation."""
    if vmem_capacity is not None and vmem_capacity >= (100 << 20):
        # v5e / v6e: 128 MiB physical VMEM -> be generous.
        return 40 << 20, 96 << 20
    if vmem_capacity is not None:
        # v7x: only 64 MiB per TensorCore -> stay well under.
        return 20 << 20, 44 << 20
    # Unknown chip: conservative defaults that fit everywhere.
    return 20 << 20, 40 << 20


def _pick_tile_n(n, c, budget_bytes, buffer_count=2):
    """Largest row tile whose pipelined input copies fit the VMEM budget.

    Accounts for lane padding: the logits block occupies max(C, 128) f32
    lanes per row, and the two (tile_n, 1) side inputs (targets, alpha_g)
    are each lane-padded to 128.
    """
    lanes_x = max(c, 128)
    per_row = buffer_count * (lanes_x * 4 + 2 * 128 * 4)
    rows = max(8, budget_bytes // max(1, per_row))
    rows = (rows // 8) * 8
    n_up = ((n + 7) // 8) * 8
    return max(8, min(rows, n_up))


def _maybe_buffered(block_shape, index_map, depth):
    """BlockSpec with pipeline depth `depth`, falling back to default."""
    if depth <= 2:
        return pl.BlockSpec(block_shape, index_map)
    buffered = getattr(pl, "Buffered", None)
    if buffered is None:
        return pl.BlockSpec(block_shape, index_map)
    try:
        return pl.BlockSpec(block_shape, index_map, pipeline_mode=buffered(depth))
    except TypeError:
        return pl.BlockSpec(block_shape, index_map)


# ---------------------------------------------------------------------------
# Wrapper
# ---------------------------------------------------------------------------
def focal_loss_self(inputs, targets, alpha, gamma=2.0, tile_n=None,
                    num_parts=None):
    """inputs: (N, C) logits; targets: (N,) int; alpha: (C,) per-class weight."""
    n, c = inputs.shape
    x = inputs.astype(jnp.float32)
    t = targets.reshape(-1).astype(jnp.int32)
    a = alpha.reshape(-1).astype(jnp.float32)

    # Hoist the per-sample alpha gather out of the kernel (O(N) XLA gather).
    alpha_g = a[t].reshape(n, 1)
    t2d = t.reshape(n, 1)

    vmem_cap, cores = _tpu_hw()
    budget, vmem_limit = _budgets(vmem_cap)

    if tile_n is None:
        tile_n = _pick_tile_n(n, c, budget)
    n_up = ((n + 7) // 8) * 8
    tile_n = max(8, (min(tile_n, n_up) // 8) * 8)

    total_tiles = -(-n // tile_n)
    if num_parts is None:
        # Only split the batch across TensorCores when the chip actually has
        # more than one (v7x); on v5e/v6e the split is pure overhead.
        num_parts = cores if (cores > 1 and total_tiles >= cores) else 1
    num_parts = max(1, min(num_parts, total_tiles))
    tiles_per_part = -(-total_tiles // num_parts)
    padded_n = num_parts * tiles_per_part * tile_n

    if padded_n != n:
        pad = padded_n - n
        x = jnp.pad(x, ((0, pad), (0, 0)))
        t2d = jnp.pad(t2d, ((0, pad), (0, 0)))
        alpha_g = jnp.pad(alpha_g, ((0, pad), (0, 0)))  # 0 -> pad rows drop out

    # When per-step DMA is tiny, a third pipeline buffer hides issue latency.
    x_block_bytes = tile_n * max(c, 128) * 4
    depth = 3 if (x_block_bytes < (512 << 10) and tiles_per_part >= 3) else 2

    kernel = functools.partial(_focal_loss_kernel, gamma=float(gamma))

    def tile_map(i, j):
        return (i * tiles_per_part + j, 0)

    out = pl.pallas_call(
        kernel,
        out_shape=jax.ShapeDtypeStruct((num_parts * 8, 128), jnp.float32),
        grid_spec=pltpu.PrefetchScalarGridSpec(
            num_scalar_prefetch=0,
            grid=(num_parts, tiles_per_part),
            in_specs=[
                _maybe_buffered((tile_n, c), tile_map, depth),
                _maybe_buffered((tile_n, 1), tile_map, depth),
                _maybe_buffered((tile_n, 1), tile_map, depth),
            ],
            out_specs=pl.BlockSpec((8, 128), lambda i, j: (i, 0)),
            scratch_shapes=[pltpu.VMEM((1, 1), jnp.float32)],
        ),
        compiler_params=pltpu.CompilerParams(
            dimension_semantics=("parallel", "arbitrary"),
            vmem_limit_bytes=vmem_limit,
        ),
    )(x, t2d, alpha_g)

    partials = out[::8, 0]                 # one partial sum per partition
    return jnp.sum(partials) / n           # size_average=True -> global mean


# ---------------------------------------------------------------------------
# Pure-JAX reference (mirrors FocalLossSelf.forward)
# ---------------------------------------------------------------------------
def focal_loss_ref(inputs, targets, alpha, gamma=2.0):
    p = jax.nn.softmax(inputs, axis=1)
    onehot = jax.nn.one_hot(targets, inputs.shape[1], dtype=inputs.dtype)
    probs = jnp.sum(p * onehot, axis=1)
    alpha_g = alpha[targets]
    batch_loss = -alpha_g * (1.0 - probs) ** gamma * jnp.log(probs)
    return jnp.mean(batch_loss)


if __name__ == "__main__":
    key = jax.random.PRNGKey(0)
    k1, k2, k3, k4, k5 = jax.random.split(key, 5)

    # Case 1: small shape consistent with the module (batch=8, classes=32);
    # FocalLossSelf(alpha=None) -> alpha = ones(class_num).
    N, C = 8, 32
    x1 = jax.random.normal(k1, (N, C), dtype=jnp.float32)
    t1 = jax.random.randint(k2, (N,), 0, C, dtype=jnp.int32)
    a1 = jnp.ones((C,), dtype=jnp.float32)

    loss1 = focal_loss_self(x1, t1, a1, gamma=2.0)
    jax.block_until_ready(loss1)
    ref1 = focal_loss_ref(x1, t1, a1, gamma=2.0)
    assert jnp.allclose(loss1, ref1, rtol=1e-5, atol=1e-6), (loss1, ref1)

    # Case 2: exercise batch tiling, remainder padding (N % tile_n != 0),
    # per-class alpha, the deeper-pipeline path, and a forced 2-way partition.
    N2, C2 = 100, 40
    x2 = jax.random.normal(k3, (N2, C2), dtype=jnp.float32)
    t2 = jax.random.randint(k4, (N2,), 0, C2, dtype=jnp.int32)
    a2 = jax.random.uniform(k5, (C2,), minval=0.25, maxval=1.0,
                            dtype=jnp.float32)

    loss2 = focal_loss_self(x2, t2, a2, gamma=2.0, tile_n=16, num_parts=2)
    jax.block_until_ready(loss2)
    ref2 = focal_loss_ref(x2, t2, a2, gamma=2.0)
    assert jnp.allclose(loss2, ref2, rtol=1e-5, atol=1e-5), (loss2, ref2)

    # Case 3: auto tile sizing (single big tile) + auto partition count.
    loss3 = focal_loss_self(x2, t2, a2, gamma=2.0)
    jax.block_until_ready(loss3)
    assert jnp.allclose(loss3, ref2, rtol=1e-5, atol=1e-5), (loss3, ref2)

    print("KERNEL_OK")
</pallas_src>

<mosaic_0001>
module attributes {stable_mosaic.version = 11 : i64} {
  func.func @_focal_loss_kernel(%arg0: i32, %arg1: i32, %arg2: memref<8x32xf32, #tpu.memory_space<vmem>>, %arg3: memref<8x1xi32, #tpu.memory_space<vmem>>, %arg4: memref<8x1xf32, #tpu.memory_space<vmem>>, %arg5: memref<8x128xf32, #tpu.memory_space<vmem>>, %arg6: memref<1x1xf32, #tpu.memory_space<vmem>>) attributes {dimension_semantics = [#tpu.dimension_semantics<parallel>, #tpu.dimension_semantics<arbitrary>], iteration_bounds = array<i64: 1, 1>, scalar_prefetch = 0 : i64, scratch_operands = 1 : i64, tpu.core_type = #tpu.core_type<tc>, window_params = [{transform_indices = @transform_0, window_bounds = array<i64: 8, 32>}, {transform_indices = @transform_1, window_bounds = array<i64: 8, 1>}, {transform_indices = @transform_2, window_bounds = array<i64: 8, 1>}, {transform_indices = @transform_3, window_bounds = array<i64: 8, 128>}]} {
    %c0_i32 = arith.constant 0 : i32
    %0 = arith.cmpi eq, %arg1, %c0_i32 : i32
    %1 = arith.extui %0 : i1 to i32
    %c0_i32_0 = arith.constant 0 : i32
    %2 = arith.cmpi ne, %1, %c0_i32_0 : i32
    scf.if %2 {
      %cst_18 = arith.constant 0.000000e+00 : f32
      %42 = vector.broadcast %cst_18 : f32 to vector<1x1xf32>
      %c0_19 = arith.constant 0 : index
      %c0_20 = arith.constant 0 : index
      %43 = vector.load %arg6[%c0_19, %c0_20] : memref<1x1xf32, #tpu.memory_space<vmem>>, vector<1x1xf32>
      tpu.vector_store %arg6[%c0_19, %c0_20], %42 {strides = array<i32>} : memref<1x1xf32, #tpu.memory_space<vmem>>, vector<1x1xf32>,
    } else {
    }
    %c0 = arith.constant 0 : index
    %c0_1 = arith.constant 0 : index
    %3 = vector.load %arg2[%c0, %c0_1] : memref<8x32xf32, #tpu.memory_space<vmem>>, vector<8x32xf32>
    %c0_2 = arith.constant 0 : index
    %c0_3 = arith.constant 0 : index
    %4 = vector.load %arg3[%c0_2, %c0_3] : memref<8x1xi32, #tpu.memory_space<vmem>>, vector<8x1xi32>
    %c0_4 = arith.constant 0 : index
    %c0_5 = arith.constant 0 : index
    %5 = vector.load %arg4[%c0_4, %c0_5] : memref<8x1xf32, #tpu.memory_space<vmem>>, vector<8x1xf32>
    %cst = arith.constant dense<0xFF800000> : vector<8xf32>
    %6 = vector.multi_reduction <maximumf>, %3, %cst [1] : vector<8x32xf32> to vector<8xf32>
    %7 = vector.shape_cast %6 : vector<8xf32> to vector<8x1xf32>
    %8 = vector.broadcast %7 : vector<8x1xf32> to vector<8x32xf32>
    %9 = arith.subf %3, %8 : vector<8x32xf32>
    %10 = math.exp %9 : vector<8x32xf32>
    %cst_6 = arith.constant dense<0.000000e+00> : vector<8xf32>
    %11 = vector.multi_reduction <add>, %10, %cst_6 [1] : vector<8x32xf32> to vector<8xf32>
    %12 = vector.shape_cast %11 : vector<8xf32> to vector<8x1xf32>
    %13 = tpu.iota {dimensions = array<i32: 1>} : vector<8x32xi32>
    %14 = vector.broadcast %4 : vector<8x1xi32> to vector<8x32xi32>
    %15 = arith.cmpi eq, %13, %14 : vector<8x32xi32>
    %cst_7 = arith.constant 0.000000e+00 : f32
    %16 = vector.broadcast %cst_7 : f32 to vector<8x32xf32>
    %17 = arith.select %15, %3, %16 : vector<8x32xi1>, vector<8x32xf32>
    %cst_8 = arith.constant dense<0.000000e+00> : vector<8xf32>
    %18 = vector.multi_reduction <add>, %17, %cst_8 [1] : vector<8x32xf32> to vector<8xf32>
    %19 = vector.shape_cast %18 : vector<8xf32> to vector<8x1xf32>
    %20 = arith.subf %19, %7 : vector<8x1xf32>
    %21 = math.log %12 : vector<8x1xf32>
    %22 = arith.subf %20, %21 : vector<8x1xf32>
    %23 = math.exp %22 : vector<8x1xf32>
    %cst_9 = arith.constant 1.000000e+00 : f32
    %24 = vector.broadcast %cst_9 : f32 to vector<8x1xf32>
    %25 = arith.subf %24, %23 : vector<8x1xf32>
    %26 = arith.mulf %25, %25 : vector<8x1xf32>
    %cst_10 = arith.constant 0.000000e+00 : f32
    %27 = vector.broadcast %cst_10 : f32 to vector<8x1xf32>
    %28 = arith.subf %27, %5 : vector<8x1xf32>
    %29 = arith.mulf %28, %26 : vector<8x1xf32>
    %30 = arith.mulf %29, %22 : vector<8x1xf32>
    %c0_11 = arith.constant 0 : index
    %c0_12 = arith.constant 0 : index
    %31 = vector.load %arg6[%c0_11, %c0_12] : memref<1x1xf32, #tpu.memory_space<vmem>>, vector<1x1xf32>
    %32 = vector.shape_cast %30 : vector<8x1xf32> to vector<1x8x1xf32>
    %cst_13 = arith.constant dense<0.000000e+00> : vector<1xf32>
    %33 = vector.multi_reduction <add>, %32, %cst_13 [1, 2] : vector<1x8x1xf32> to vector<1xf32>
    %34 = vector.shape_cast %33 : vector<1xf32> to vector<1x1x1xf32>
    %35 = vector.extract %34[0, 0, 0] : f32 from vector<1x1x1xf32>
    %36 = vector.broadcast %35 : f32 to vector<1x1xf32>
    %37 = arith.addf %31, %36 : vector<1x1xf32>
    %c0_14 = arith.constant 0 : index
    %c0_15 = arith.constant 0 : index
    %38 = vector.load %arg6[%c0_14, %c0_15] : memref<1x1xf32, #tpu.memory_space<vmem>>, vector<1x1xf32>
    tpu.vector_store %arg6[%c0_14, %c0_15], %37 {strides = array<i32>} : memref<1x1xf32, #tpu.memory_space<vmem>>, vector<1x1xf32>,
    %c0_i32_16 = arith.constant 0 : i32
    %39 = arith.cmpi eq, %arg1, %c0_i32_16 : i32
    %40 = arith.extui %39 : i1 to i32
    %c0_i32_17 = arith.constant 0 : i32
    %41 = arith.cmpi ne, %40, %c0_i32_17 : i32
    scf.if %41 {
      %c0_18 = arith.constant 0 : index
      %c0_19 = arith.constant 0 : index
      %42 = vector.load %arg6[%c0_18, %c0_19] : memref<1x1xf32, #tpu.memory_space<vmem>>, vector<1x1xf32>
      %43 = vector.shape_cast %42 : vector<1x1xf32> to vector<1x1xf32>
      %44 = vector.broadcast %43 : vector<1x1xf32> to vector<8x128xf32>
      %c0_20 = arith.constant 0 : index
      %c0_21 = arith.constant 0 : index
      %45 = vector.load %arg5[%c0_20, %c0_21] : memref<8x128xf32, #tpu.memory_space<vmem>>, vector<8x128xf32>
      tpu.vector_store %arg5[%c0_20, %c0_21], %44 {strides = array<i32>} : memref<8x128xf32, #tpu.memory_space<vmem>>, vector<8x128xf32>,
    } else {
    }
    return
  }
  func.func @transform_0(%arg0: i32, %arg1: i32) -> (i32, i32) {
    %c1_i32 = arith.constant 1 : i32
    %0 = arith.muli %arg0, %c1_i32 : i32
    %1 = arith.addi %0, %arg1 : i32
    %c0_i32 = arith.constant 0 : i32
    %c0_i32_0 = arith.constant 0 : i32
    return %1, %c0_i32 : i32, i32
  }
  func.func @transform_1(%arg0: i32, %arg1: i32) -> (i32, i32) {
    %c1_i32 = arith.constant 1 : i32
    %0 = arith.muli %arg0, %c1_i32 : i32
    %1 = arith.addi %0, %arg1 : i32
    %c0_i32 = arith.constant 0 : i32
    %c0_i32_0 = arith.constant 0 : i32
    return %1, %c0_i32 : i32, i32
  }
  func.func @transform_2(%arg0: i32, %arg1: i32) -> (i32, i32) {
    %c1_i32 = arith.constant 1 : i32
    %0 = arith.muli %arg0, %c1_i32 : i32
    %1 = arith.addi %0, %arg1 : i32
    %c0_i32 = arith.constant 0 : i32
    %c0_i32_0 = arith.constant 0 : i32
    return %1, %c0_i32 : i32, i32
  }
  func.func @transform_3(%arg0: i32, %arg1: i32) -> (i32, i32) {
    %c0_i32 = arith.constant 0 : i32
    %c0_i32_0 = arith.constant 0 : i32
    return %arg0, %c0_i32 : i32, i32
  }
}

</mosaic_0001>

<llo_original>
// kernel: tpu_custom_call.1
$region0: #{tpu_custom_call.1}
  #allocation0 [shape = 'u32[]', space=smem, size = 0x4, offset = 0x4, fixed_abs, tag = 'smem constant byte address 0x4 - core index']
  #allocation1 [shape = 'u32[72,128]{1,0:T(1,128)}', space=vmem, size = 0x9000, scoped, tag = 'internal scratch']
  #allocation2 [shape = 'f32[1,1]{1,0:T(1,128)}', space=vmem, size = 0x200, scoped, tag = 'scratch operand']
  %s0 = inlined_call_operand.vmem [shape: f32[8,32], index: 0, kind: input, shape index: {}]
  %s1 = inlined_call_operand.vmem [shape: s32[8,1], index: 1, kind: input, shape index: {}]
  %s2 = inlined_call_operand.vmem [shape: f32[8,1], index: 2, kind: input, shape index: {}]
  %s3 = inlined_call_operand.hbm [shape: f32[8,128], index: 3, kind: output, shape index: {}]
  %s4 = sld [smem:[#allocation0]]
  $region30: #{tpu_custom_call.1} parent=0
    _
  %s6 = ssub.s32 1, %s4
  %s7 = scalar_select 0, %s6, %s4
  $region1: #{tpu_custom_call.1} parent=0
    #allocation3 [shape = 'u8[4096]{0}', space=vmem, size = 0x1000, scoped, tag = 'output window, operand 0, single buffered']
    #allocation4 [shape = 's32[1]{0}', space=sflag, size = 0x4, scoped, tag = 'scoped memory for tpu_custom_call.1']
    %8 = vsyncpa [#allocation4], 0
    // Predicated region
    $region2: #{tpu_custom_call.1} parent=1 // pred_check
      _
    $region3: #{tpu_custom_call.1} parent=1 // pred_check_branch
      %10 = sbr.rel (0) target = $region5
    $region4: #{tpu_custom_call.1} parent=1 // pred_region
      %s11 = sadd.s32 0, 0
      %p12 = scmp.lt.s32.totalorder %s11, 0
      %s13 = scalar_select %p12, %s11, 0
      %s14 = smul.addr %s13, 8
      %s15 = scalar_lea.vmem %s0, %s14
      %s16 = sadd.s32 0, 0
    $region5: #{tpu_custom_call.1} parent=1 // pred_fallthru
      _
    // Predicated region
    $region6: #{tpu_custom_call.1} parent=1 // pred_check
      _
    $region7: #{tpu_custom_call.1} parent=1 // pred_check_branch
      %18 = sbr.rel (0) target = $region9
    $region8: #{tpu_custom_call.1} parent=1 // pred_region
      %s19 = sadd.s32 0, 0
      %p20 = scmp.lt.s32.totalorder %s19, 0
      %s21 = scalar_select %p20, %s19, 0
      %s22 = smul.addr %s21, 8
      %s23 = scalar_lea.vmem %s1, %s22
      %s24 = sadd.s32 0, 0
    $region9: #{tpu_custom_call.1} parent=1 // pred_fallthru
      _
    // Predicated region
    $region10: #{tpu_custom_call.1} parent=1 // pred_check
      _
    $region11: #{tpu_custom_call.1} parent=1 // pred_check_branch
      %26 = sbr.rel (0) target = $region13
    $region12: #{tpu_custom_call.1} parent=1 // pred_region
      %s27 = sadd.s32 0, 0
      %p28 = scmp.lt.s32.totalorder %s27, 0
      %s29 = scalar_select %p28, %s27, 0
      %s30 = smul.addr %s29, 8
      %s31 = scalar_lea.vmem %s2, %s30
      %s32 = sadd.s32 0, 0
    $region13: #{tpu_custom_call.1} parent=1 // pred_fallthru
      _
    %s33 = sadd.s32 0, 0
    %p34 = scmp.lt.s32.totalorder %s33, 0
    %s35 = scalar_select %p34, %s33, 0
    %s36 = smul.addr %s35, 8
    %s37 = scalar_lea.vmem %s0, %s36
    %s38 = sadd.s32 0, 0
    %p39 = scmp.lt.s32.totalorder %s38, 0
    %s40 = scalar_select %p39, %s38, 0
    %s41 = smul.addr %s40, 8
    %s42 = scalar_lea.vmem %s1, %s41
    %s43 = sadd.s32 0, 0
    %p44 = scmp.lt.s32.totalorder %s43, 0
    %s45 = scalar_select %p44, %s43, 0
    %s46 = smul.addr %s45, 8
    %s47 = scalar_lea.vmem %s2, %s46
    %s48 = sadd.s32 0, 0
    %p49 = scmp.lt.s32.totalorder %s48, 0
    %s50 = scalar_select %p49, %s48, 0
    %s51 = smul.addr %s50, 8
    %s52 = scalar_lea.vmem %s0, %s51
    %s53 = sadd.s32 0, 0
    %s54 = sadd.s32 0, 0
    %p55 = scmp.lt.s32.totalorder %s54, 0
    %s56 = scalar_select %p55, %s54, 0
    %s57 = smul.addr %s56, 8
    %s58 = scalar_lea.vmem %s1, %s57
    %s59 = sadd.s32 0, 0
    %s60 = sadd.s32 0, 0
    %p61 = scmp.lt.s32.totalorder %s60, 0
    %s62 = scalar_select %p61, %s60, 0
    %s63 = smul.addr %s62, 8
    %s64 = scalar_lea.vmem %s2, %s63
    %s65 = sadd.s32 0, 0
    %p66 = scmp.eq.s32.totalorder 0, 0
    // Predicated region
    $region14: #{tpu_custom_call.1} parent=1 // pred_check
      %p67 = pneg %p66
    $region15: #{tpu_custom_call.1} parent=1 // pred_check_branch
      %69 = sbr.rel (%p67) target = $region17
    $region16: #{tpu_custom_call.1} parent=1 // pred_region
      %vm70 = vcmask 0
      %71 = vst.msk [vmem:[#allocation2] sm:$0x1] %vm70, 0.0
    $region17: #{tpu_custom_call.1} parent=1 // pred_fallthru
      _
    %v72 = vld [vmem:[%s52] sm:$0xff]
    %v73 = vld [vmem:[%s58] sm:$0xff]
    %v74 = vld [vmem:[%s64] sm:$0xff]
    %vm75 = vcmask 261120
    %v76 = vsel %vm75, %v72, -inf
    %77 = vmax.xlane.f32.xlu0 %v76
    %v78 = vpop.xlane.xlu0 %77
    %v79 = vsub.f32 %v72, %v78
    %v80 = vmul.f32 %v79, 1.442695
    %v81 = vpow.pop %v80
    %v82 = vsel %vm75, %v81, 0.0
    %83 = vadd.xlane.f32.xlu0 %v82
    %v84 = vpop.xlane.xlu0 %83
    %v85 = vlaneseq
    %v86 = vand.u32 %v85, 127
    %87 = vset.pattern.permute.xlu0 0
    %88 = vperm.xlu0 %87, %v73
    %v89 = vpop.permute.xlu0 %88
    %vm90 = vcmp.eq.s32.totalorder %v86, %v89
    %v91 = vsel %vm90, %v72, 0.0
    %v92 = vsel %vm75, %v91, 0.0
    %93 = vadd.xlane.f32.xlu0 %v92
    %v94 = vpop.xlane.xlu0 %93
    %v95 = vsub.f32 %v94, %v78
    %v96 = vlog2.pop %v84
    %v97 = vmul.f32 %v96, 0.6931472
    %v98 = vsub.f32 %v95, %v97
    %v99 = vmul.f32 %v98, 1.442695
    %v100 = vpow.pop %v99
    %v101 = vsub.f32 1.0, %v100
    %v102 = vmul.f32 %v101, %v101
    %v103 = vsub.f32 0.0, %v74
    %v104 = vmul.f32 %v103, %v102
    %v105 = vmul.f32 %v104, %v98
    %v106 = vld [vmem:[#allocation2] sm:$0x1]
    %vm107 = vcmask 7168
    %v108 = vsel %vm107, %v105, 0.0
    %109 = vadd.xlane.f32.xlu0 %v108
    %v110 = vpop.xlane.xlu0 %109
    %v111 = vrot.slane %v110, 4
    %v112 = vadd.f32 %v110, %v111
    %v113 = vrot.slane %v112, 2
    %v114 = vadd.f32 %v112, %v113
    %v115 = vrot.slane %v114, 1
    %v116 = vadd.f32 %v114, %v115
    %s117 = vtos %v116
    %v118 = vstv %s117
    %v119 = vadd.f32 %v106, %v118
    %vm120 = vcmask 0
    %121 = vst.msk [vmem:[#allocation2] sm:$0x1] %vm120, %v119
    // Predicated region
    $region18: #{tpu_custom_call.1} parent=1 // pred_check
      %p122 = pneg %p66
    $region19: #{tpu_custom_call.1} parent=1 // pred_check_branch
      %124 = sbr.rel (%p122) target = $region21
    $region20: #{tpu_custom_call.1} parent=1 // pred_region
      %v125 = vld [vmem:[#allocation2] sm:$0x1]
      %v127 = vperm.slane %v125, 0
      %128 = vset.pattern.permute.xlu0 0
      %129 = vperm.xlu0 %128, %v127
      %v130 = vpop.permute.xlu0 %129
      %132 = vst [vmem:[#allocation3] sm:$0xff] %v130
    $region21: #{tpu_custom_call.1} parent=1 // pred_fallthru
      _
    // Predicated region
    $region22: #{tpu_custom_call.1} parent=1 // pred_check
      _
    $region23: #{tpu_custom_call.1} parent=1 // pred_check_branch
      %134 = sbr.rel (0) target = $region25
    $region24: #{tpu_custom_call.1} parent=1 // pred_region
      %136 = vsyncadd [#allocation4], 0
      %s138 = sshll.u32 [#allocation3], 4
      %s139 = int_to_ptr.vmem [resolvable:$true] %s138
      %s140 = sshll.u32 %s3, 4
      %s141 = int_to_ptr.hbm [resolvable:$true] %s140
      %143 = dma.vmem_to_hbm [thread:$0]  %s139, 128, %s141, [#allocation4]
    $region25: #{tpu_custom_call.1} parent=1 // pred_fallthru
      _
    // Predicated region
    $region26: #{tpu_custom_call.1} parent=1 // pred_check
      _
    $region27: #{tpu_custom_call.1} parent=1 // pred_check_branch
      %145 = sbr.rel (0) target = $region29
    $region28: #{tpu_custom_call.1} parent=1 // pred_region
      %147 = dma.done [#allocation4], 128
    $region29: #{tpu_custom_call.1} parent=1 // pred_fallthru
      _
    %148 = vsyncpa [#allocation4], 1

</llo_original>
